<compile_context>
chip_gen: v7x
topology: tpu7x:2x2x1
jax: 0.10.0
libtpu: 0.0.40
codegen_flags: <defaults>
</compile_context>

<pallas_src>
from functools import partial
from math import floor

import numpy as np
import jax
import jax.numpy as jnp
from jax import lax
from jax.experimental import pallas as pl
from jax.experimental.pallas import tpu as pltpu

MAX_LABELS = 8  # static upper bound on the number of erase rectangles per call


def _erase_kernel(bounds_ref, fill_ref, x_ref, o_ref):
    """Fill all active rectangles of a row-tile with a constant uint8 value.

    bounds_ref : SMEM int32 [n_rects*4] flat rows of (row_lo, row_hi, col_lo, col_hi)
                 in the band-local (rows, W*C) view.
    fill_ref   : SMEM int32 [1]           constant fill value (0..255)
    x_ref      : VMEM uint8 [tile_h, W*C] input row-tile
    o_ref      : VMEM uint8 [tile_h, W*C] output row-tile (aliases the input buffer)
    """
    th, wc = o_ref.shape
    n_rects = bounds_ref.shape[0] // 4
    row0 = pl.program_id(0) * th                      # band-local first row of this tile (scalar)

    # Tiny 1-D iotas; all full-tile work below is one broadcast-AND / OR per rect.
    rows = lax.broadcasted_iota(jnp.int32, (th, 1), 0)
    cols = lax.broadcasted_iota(jnp.int32, (1, wc), 1)

    acc = None
    for i in range(n_rects):                          # static unroll over ACTIVE rects only
        r_lo = bounds_ref[4 * i + 0] - row0           # fold tile offset on the scalar unit
        r_hi = bounds_ref[4 * i + 1] - row0
        c_lo = bounds_ref[4 * i + 2]
        c_hi = bounds_ref[4 * i + 3]
        row_m = jnp.where((rows >= r_lo) & (rows < r_hi), jnp.int32(255), jnp.int32(0))
        col_m = jnp.where((cols >= c_lo) & (cols < c_hi), jnp.int32(255), jnp.int32(0))
        rect = row_m & col_m                          # (th, wc) via broadcast: 1 full-tile AND
        acc = rect if acc is None else (acc | rect)   # 1 full-tile OR per extra rect

    m8 = acc.astype(jnp.uint8)                        # pack once -> 0x00 / 0xFF, uint8
    fill = fill_ref[0].astype(jnp.uint8)              # scalar broadcast, hoisted
    x = x_ref[...]
    o_ref[...] = (x & ~m8) | (fill & m8)              # packed-uint8 bitwise select


@partial(jax.jit,
         static_argnames=("tile_h", "band_t0", "band_tiles"),
         donate_argnums=(0,))
def _erase_call(x_hwc_u8, bounds_flat, fill_i32, *, tile_h, band_t0, band_tiles):
    H, W, C = x_hwc_u8.shape
    WC = W * C
    x2d = x_hwc_u8.reshape(H, WC)                     # lane-dense 2-D view, no data movement
    out2d = pl.pallas_call(
        _erase_kernel,
        out_shape=jax.ShapeDtypeStruct((H, WC), x2d.dtype),
        grid=(band_tiles,),                           # only row-tiles covering the erased band
        in_specs=[
            pl.BlockSpec(memory_space=pltpu.MemorySpace.SMEM),     # rect bounds table
            pl.BlockSpec(memory_space=pltpu.MemorySpace.SMEM),     # fill value
            pl.BlockSpec((tile_h, WC), lambda i: (i + band_t0, 0)),
        ],
        out_specs=pl.BlockSpec((tile_h, WC), lambda i: (i + band_t0, 0)),
        input_output_aliases={2: 0},                  # rows outside the band keep input data
        compiler_params=pltpu.CompilerParams(
            dimension_semantics=("parallel",),        # shard band-tiles across TCs (v7x)
            vmem_limit_bytes=32 * 1024 * 1024,
        ),
    )(bounds_flat, fill_i32, x2d)
    return out2d.reshape(H, W, C)


def _choose_tile_h(band_rows, H, WC):
    """Row-tile size: budget in-kernel temporaries, aim for ~4 grid steps over the band."""
    budget = 16 * 1024 * 1024        # conservative also for v7x (64 MiB VMEM, 32 MiB scoped)
    bytes_per_row = 14 * WC          # u8 in+out double-buffered (~4B/elt) + i32/u8 mask temps (~10B/elt)
    vmem_rows = max(32, (budget // bytes_per_row) // 32 * 32)
    target = max(32, ((-(-band_rows // 4)) + 31) // 32 * 32)   # ~4 steps, 32-row u8 sublane pack
    tile = int(min(vmem_rows, target))
    if tile >= H:
        return H                     # full-height block is always a legal block shape
    return tile


def erase_rects_pallas(x_hwc_u8, rects, fill_value, tile_rows=None):
    """Apply erase rectangles (rows = (sy, sx, h, w), h == 0 => inactive) to an HWC uint8 image."""
    rects = np.atleast_2d(np.asarray(rects, dtype=np.int64))
    active = rects[rects[:, 2] > 0]                   # keep only active slots (h > 0)
    if active.shape[0] == 0:
        return x_hwc_u8                               # nothing to erase, skip the kernel

    H, W, C = x_hwc_u8.shape
    WC = W * C

    # Affected row band -> band-restricted grid.
    row_lo = int(active[:, 0].min())
    row_hi = min(int((active[:, 0] + active[:, 2]).max()), H)
    tile_h = int(tile_rows) if tile_rows is not None else _choose_tile_h(row_hi - row_lo, H, WC)
    t0 = row_lo // tile_h
    t1 = min(pl.cdiv(row_hi, tile_h), pl.cdiv(H, tile_h))
    band_tiles = max(1, int(t1) - t0)
    row_base = t0 * tile_h                            # band-local row coordinates for the kernel

    # Flattened per-rect bounds in the band-local (rows, W*C) view.
    bounds = np.empty((active.shape[0], 4), dtype=np.int32)
    bounds[:, 0] = active[:, 0] - row_base                    # row_lo
    bounds[:, 1] = active[:, 0] + active[:, 2] - row_base     # row_hi
    bounds[:, 2] = active[:, 1] * C                           # col_lo = sx * C
    bounds[:, 3] = (active[:, 1] + active[:, 3]) * C          # col_hi = (sx + w) * C
    bounds_flat = jnp.asarray(bounds.reshape(-1), dtype=jnp.int32)

    fill_i32 = jnp.asarray([int(fill_value) & 0xFF], dtype=jnp.int32)
    return _erase_call(jnp.asarray(x_hwc_u8), bounds_flat, fill_i32,
                       tile_h=tile_h, band_t0=t0, band_tiles=band_tiles)


class RandomErasing:
    """JAX/Pallas port of the reference RandomErasing module."""

    def __init__(self, p=0.5, scale=(0.07, 0.1), ratio=(0.33, 3),
                 value_mode=0.0, seed=0):
        self.p = p
        self.scale = (scale[1] - scale[0], scale[0])
        self.ratio = (ratio[1] - ratio[0], ratio[0])
        self.value_mode = value_mode
        self._rng = np.random.RandomState(seed)  # deterministic replacement for torch/np RNG

    def _compute_rects(self, x_shape_hwc, label, nlabel):
        """Scalar host-side replica of the reference's rectangle sampling.

        Returns int32 [MAX_LABELS, 4] rows of (sy, sx, h, w); h == 0 marks an unused slot.
        """
        H, W, _ = x_shape_hwc
        rects = np.zeros((MAX_LABELS, 4), dtype=np.int32)
        n = 0
        for lab in np.asarray(label, dtype=np.float64)[:nlabel]:
            position = [lab[1], lab[2], lab[5], lab[6]]
            if (self._rng.random_sample() > self.p
                    or (position[2] - position[0] - 2 <= 0
                        or position[3] - position[1] - 2 <= 0)):
                continue
            ratio = self._rng.random_sample() * self.ratio[0] + self.ratio[1]
            # NOTE: reference uses self.ratio[1] (not scale[1]) here -- reproduced as-is.
            scale = self._rng.random_sample() * self.scale[0] + self.ratio[1]
            area = (position[2] - position[0]) * (position[3] - position[1]) * scale
            w = min((area / ratio) ** 0.5, position[2] - position[0] - 2)
            h = min(w * ratio, position[3] - position[1] - 2)
            px = position[2] - position[0] - w
            py = position[3] - position[1] - h
            sx = self._rng.random_sample() * px + position[0]
            sy = self._rng.random_sample() * py + position[1]
            sx = floor(min(max(sx, 0), W - 1))
            sy = floor(min(max(sy, 0), H - 1))
            h = floor(min(max(h, 1), H - sy))
            w = floor(min(max(w, 1), W - sx))
            if n < MAX_LABELS:
                rects[n] = (sy, sx, h, w)
                n += 1
        return rects

    def __call__(self, x, label, nlabel):
        rects = self._compute_rects(x.shape, label, int(nlabel))
        if self.value_mode == 'mix':
            # TODO(synk): 'mix' mode is unimplemented in the reference as well ("under devel").
            pass
        elif self.value_mode == 'random':
            # TODO(synk): 'random' fill needs per-rect fresh uint8 noise; not ported.
            pass
        elif isinstance(self.value_mode, float):
            if int((rects[:, 2] > 0).sum()) == 0:
                return (x, label, nlabel)  # host early-exit: nothing to erase, skip the kernel
            x = erase_rects_pallas(x, rects, self.value_mode)
        return (x, label, nlabel)


def _apply_rects_numpy(x_hwc_u8, rects, fill_value):
    """Pure NumPy reference for the kernel's masked fill."""
    y = np.array(x_hwc_u8)
    for sy, sx, h, w in np.atleast_2d(np.asarray(rects)):
        if h > 0:
            y[sy:sy + h, sx:sx + w, :] = np.uint8(fill_value)
    return y


if __name__ == "__main__":
    # Primary shape is lane-dense: W*C = 128*3 = 384 (multiple of 128 -> unmasked stores).
    H, W, C = 64, 128, 3
    x = jax.random.randint(jax.random.PRNGKey(0), (H, W, C), 0, 256,
                           dtype=jnp.int32).astype(jnp.uint8)
    x_np = np.asarray(x)  # host copy for the reference check (x itself gets donated)

    # labels: [cls, x0, y0, _, _, x1, y1]; only the first `nlabel` rows are used.
    label = np.zeros((4, 7), dtype=np.float32)
    label[0] = [0.0, 8.0, 6.0, 0.0, 0.0, 100.0, 56.0]
    label[1] = [1.0, 20.0, 2.0, 0.0, 0.0, 90.0, 40.0]
    nlabel = 2

    # p=0.9 so the fixed-seed RNG actually triggers erasing; value_mode=0.0 (float branch).
    aug = RandomErasing(p=0.9, scale=(0.07, 0.1), ratio=(0.33, 3), value_mode=0.0, seed=0)
    check_aug = RandomErasing(p=0.9, scale=(0.07, 0.1), ratio=(0.33, 3), value_mode=0.0, seed=0)
    check_rects = check_aug._compute_rects((H, W, C), label, nlabel)
    assert (check_rects[:, 2] > 0).any()  # at least one rectangle sampled with this seed
    expected = _apply_rects_numpy(x_np, check_rects, 0.0)

    # 1) Full module path (band-restricted grid, heuristic tile, donated input).
    x_out, _, _ = aug(x, label, nlabel)
    x_out = jax.block_until_ready(x_out)
    assert x_out.shape == (H, W, C) and x_out.dtype == jnp.uint8
    np.testing.assert_array_equal(np.asarray(x_out), expected)

    # 2) Forced 32-row tiles -> multi-tile band, exercises the pipelined "parallel" grid.
    x_tiled = erase_rects_pallas(jnp.asarray(x_np), check_rects, 0.0, tile_rows=32)
    np.testing.assert_array_equal(np.asarray(jax.block_until_ready(x_tiled)), expected)

    # 3) Non-lane-dense width (W*C = 144), explicit rects, nonzero fill (masked tail stores).
    H2, W2, C2 = 64, 48, 3
    x2 = jax.random.randint(jax.random.PRNGKey(1), (H2, W2, C2), 0, 256,
                            dtype=jnp.int32).astype(jnp.uint8)
    x2_np = np.asarray(x2)
    rects2 = np.array([[6, 4, 20, 30],
                       [40, 10, 16, 25]], dtype=np.int32)   # rows of (sy, sx, h, w)
    expected2 = _apply_rects_numpy(x2_np, rects2, 7.0)
    x2_out = erase_rects_pallas(x2, rects2, 7.0, tile_rows=32)
    np.testing.assert_array_equal(np.asarray(jax.block_until_ready(x2_out)), expected2)

    print("KERNEL_OK")
</pallas_src>

<mosaic_0001>
module attributes {stable_mosaic.version = 11 : i64} {
  func.func @_erase_kernel(%arg0: i32, %arg1: memref<8xi32, #tpu.memory_space<smem>>, %arg2: memref<1xi32, #tpu.memory_space<smem>>, %arg3: memref<32x384xi8, #tpu.memory_space<vmem>>, %arg4: memref<32x384xi8, #tpu.memory_space<vmem>>) attributes {dimension_semantics = [#tpu.dimension_semantics<parallel>], iteration_bounds = array<i64: 2>, scalar_prefetch = 0 : i64, scratch_operands = 0 : i64, tpu.core_type = #tpu.core_type<tc>, window_params = [{transform_indices = @transform_0, window_bounds = array<i64: 8>}, {transform_indices = @transform_1, window_bounds = array<i64: 1>}, {transform_indices = @transform_2, window_bounds = array<i64: 32, 384>}, {transform_indices = @transform_3, window_bounds = array<i64: 32, 384>}]} {
    %c32_i32 = arith.constant 32 : i32
    %0 = arith.muli %arg0, %c32_i32 : i32
    %1 = tpu.iota {dimensions = array<i32: 0>} : vector<32x1xi32>
    %2 = tpu.iota {dimensions = array<i32: 1>} : vector<1x384xi32>
    %c0 = arith.constant 0 : index
    %3 = memref.load %arg1[%c0] : memref<8xi32, #tpu.memory_space<smem>>
    %4 = arith.subi %3, %0 : i32
    %c1 = arith.constant 1 : index
    %5 = memref.load %arg1[%c1] : memref<8xi32, #tpu.memory_space<smem>>
    %6 = arith.subi %5, %0 : i32
    %c2 = arith.constant 2 : index
    %7 = memref.load %arg1[%c2] : memref<8xi32, #tpu.memory_space<smem>>
    %c3 = arith.constant 3 : index
    %8 = memref.load %arg1[%c3] : memref<8xi32, #tpu.memory_space<smem>>
    %9 = vector.broadcast %4 : i32 to vector<32x1xi32>
    %10 = arith.cmpi sge, %1, %9 : vector<32x1xi32>
    %11 = vector.broadcast %6 : i32 to vector<32x1xi32>
    %12 = arith.cmpi slt, %1, %11 : vector<32x1xi32>
    %13 = arith.andi %10, %12 : vector<32x1xi1>
    %c255_i32 = arith.constant 255 : i32
    %c0_i32 = arith.constant 0 : i32
    %14 = vector.broadcast %c255_i32 : i32 to vector<32x1xi32>
    %15 = vector.broadcast %c0_i32 : i32 to vector<32x1xi32>
    %16 = arith.select %13, %14, %15 : vector<32x1xi1>, vector<32x1xi32>
    %17 = vector.broadcast %7 : i32 to vector<1x384xi32>
    %18 = arith.cmpi sge, %2, %17 : vector<1x384xi32>
    %19 = vector.broadcast %8 : i32 to vector<1x384xi32>
    %20 = arith.cmpi slt, %2, %19 : vector<1x384xi32>
    %21 = arith.andi %18, %20 : vector<1x384xi1>
    %c255_i32_0 = arith.constant 255 : i32
    %c0_i32_1 = arith.constant 0 : i32
    %22 = vector.broadcast %c255_i32_0 : i32 to vector<1x384xi32>
    %23 = vector.broadcast %c0_i32_1 : i32 to vector<1x384xi32>
    %24 = arith.select %21, %22, %23 : vector<1x384xi1>, vector<1x384xi32>
    %25 = vector.broadcast %16 : vector<32x1xi32> to vector<32x384xi32>
    %26 = vector.broadcast %24 : vector<1x384xi32> to vector<32x384xi32>
    %27 = arith.andi %25, %26 : vector<32x384xi32>
    %c4 = arith.constant 4 : index
    %28 = memref.load %arg1[%c4] : memref<8xi32, #tpu.memory_space<smem>>
    %29 = arith.subi %28, %0 : i32
    %c5 = arith.constant 5 : index
    %30 = memref.load %arg1[%c5] : memref<8xi32, #tpu.memory_space<smem>>
    %31 = arith.subi %30, %0 : i32
    %c6 = arith.constant 6 : index
    %32 = memref.load %arg1[%c6] : memref<8xi32, #tpu.memory_space<smem>>
    %c7 = arith.constant 7 : index
    %33 = memref.load %arg1[%c7] : memref<8xi32, #tpu.memory_space<smem>>
    %34 = vector.broadcast %29 : i32 to vector<32x1xi32>
    %35 = arith.cmpi sge, %1, %34 : vector<32x1xi32>
    %36 = vector.broadcast %31 : i32 to vector<32x1xi32>
    %37 = arith.cmpi slt, %1, %36 : vector<32x1xi32>
    %38 = arith.andi %35, %37 : vector<32x1xi1>
    %c255_i32_2 = arith.constant 255 : i32
    %c0_i32_3 = arith.constant 0 : i32
    %39 = vector.broadcast %c255_i32_2 : i32 to vector<32x1xi32>
    %40 = vector.broadcast %c0_i32_3 : i32 to vector<32x1xi32>
    %41 = arith.select %38, %39, %40 : vector<32x1xi1>, vector<32x1xi32>
    %42 = vector.broadcast %32 : i32 to vector<1x384xi32>
    %43 = arith.cmpi sge, %2, %42 : vector<1x384xi32>
    %44 = vector.broadcast %33 : i32 to vector<1x384xi32>
    %45 = arith.cmpi slt, %2, %44 : vector<1x384xi32>
    %46 = arith.andi %43, %45 : vector<1x384xi1>
    %c255_i32_4 = arith.constant 255 : i32
    %c0_i32_5 = arith.constant 0 : i32
    %47 = vector.broadcast %c255_i32_4 : i32 to vector<1x384xi32>
    %48 = vector.broadcast %c0_i32_5 : i32 to vector<1x384xi32>
    %49 = arith.select %46, %47, %48 : vector<1x384xi1>, vector<1x384xi32>
    %50 = vector.broadcast %41 : vector<32x1xi32> to vector<32x384xi32>
    %51 = vector.broadcast %49 : vector<1x384xi32> to vector<32x384xi32>
    %52 = arith.andi %50, %51 : vector<32x384xi32>
    %53 = arith.ori %27, %52 : vector<32x384xi32>
    %54 = arith.trunci %53 : vector<32x384xi32> to vector<32x384xi8>
    %c0_6 = arith.constant 0 : index
    %55 = memref.load %arg2[%c0_6] : memref<1xi32, #tpu.memory_space<smem>>
    %56 = arith.trunci %55 : i32 to i8
    %c0_7 = arith.constant 0 : index
    %c0_8 = arith.constant 0 : index
    %57 = vector.load %arg3[%c0_7, %c0_8] : memref<32x384xi8, #tpu.memory_space<vmem>>, vector<32x384xi8>
    %cst = arith.constant dense<-1> : vector<32x384xi8>
    %58 = arith.xori %54, %cst : vector<32x384xi8>
    %59 = arith.andi %57, %58 : vector<32x384xi8>
    %60 = vector.broadcast %56 : i8 to vector<32x384xi8>
    %61 = arith.andi %60, %54 : vector<32x384xi8>
    %62 = arith.ori %59, %61 : vector<32x384xi8>
    %c0_9 = arith.constant 0 : index
    %c0_10 = arith.constant 0 : index
    %63 = vector.load %arg4[%c0_9, %c0_10] : memref<32x384xi8, #tpu.memory_space<vmem>>, vector<32x384xi8>
    tpu.vector_store %arg4[%c0_9, %c0_10], %62 {strides = array<i32>} : memref<32x384xi8, #tpu.memory_space<vmem>>, vector<32x384xi8>,
    return
  }
  func.func @transform_0(%arg0: i32) -> i32 {
    %c0_i32 = arith.constant 0 : i32
    %c0_i32_0 = arith.constant 0 : i32
    return %c0_i32 : i32
  }
  func.func @transform_1(%arg0: i32) -> i32 {
    %c0_i32 = arith.constant 0 : i32
    %c0_i32_0 = arith.constant 0 : i32
    return %c0_i32 : i32
  }
  func.func @transform_2(%arg0: i32) -> (i32, i32) {
    %c0_i32 = arith.constant 0 : i32
    %0 = arith.addi %arg0, %c0_i32 : i32
    %c0_i32_0 = arith.constant 0 : i32
    %c0_i32_1 = arith.constant 0 : i32
    return %0, %c0_i32_0 : i32, i32
  }
  func.func @transform_3(%arg0: i32) -> (i32, i32) {
    %c0_i32 = arith.constant 0 : i32
    %0 = arith.addi %arg0, %c0_i32 : i32
    %c0_i32_0 = arith.constant 0 : i32
    %c0_i32_1 = arith.constant 0 : i32
    return %0, %c0_i32_0 : i32, i32
  }
}

</mosaic_0001>

<llo_original>
// kernel: _erase_call.1
$region0: #{_erase_call.1}
  #allocation0 [shape = 'u32[]', space=smem, size = 0x4, offset = 0x4, fixed_abs, tag = 'smem constant byte address 0x4 - core index']
  #allocation1 [shape = 'u32[144,128]{1,0:T(1,128)}', space=vmem, size = 0x12000, scoped, tag = 'internal scratch']
  #allocation2 [shape = 's32[1]{0:T(128)S(6)}', space=smem, size = 0x200, scoped, tag = 'scoped memory for _erase_call.1']
  %s0 = inlined_call_operand.vmem [shape: s32[8], index: 0, kind: input, shape index: {}]
  %s1 = inlined_call_operand.<no memory space> [shape: s32[1], index: 1, kind: input, shape index: {}]
  %s2 = inlined_call_operand.vmem [shape: u8[64,384], index: 2, kind: input, shape index: {}, may-alias: {2,3}]
  %s3 = inlined_call_operand.vmem [shape: u8[64,384], index: 3, kind: output, shape index: {}, may-alias: {2,3}]
  %s4 = sld [smem:[#allocation0]]
  $region49: #{_erase_call.1} parent=0
    _
  %s6 = ssub.s32 1, %s4
  %s7 = scalar_select 0, %s6, %s4
  %8 = sst [smem:[#allocation2]] %s1
  $region1: #{_erase_call.1} parent=0
    #allocation3 [shape = 'u8[512]{0}', space=smem, size = 0x200, scoped, tag = 'input window, operand 0, single buffered']
    #allocation4 [shape = 's32[2]{0}', space=sflag, size = 0x8, scoped, tag = 'scoped memory for _erase_call.1']
    %9 = vsyncpa [#allocation4], 0
    loop: start=0, step=1, limit=4
    $region2: #{_erase_call.1} parent=1 // loop_pre_header
      _
    $region3: #{_erase_call.1} parent=1 // loop_header
      %s11 = sphi 0, %s15
      %p12 = scmp.ge.s32.totalorder %s11, 4
      %s19 = sphi 0, %s19
      %s21 = sphi 0, %s19
      %s22 = sphi 0, %s21
      %s36 = sphi 0, %s22
      %s40 = sphi 0, %s40
      %s42 = sphi 0, %s40
      %s43 = sphi 0, %s42
      %s57 = sphi 0, %s43
      %s63 = sphi 0, %s65
      %s66 = sphi 0, %s63
      %s67 = sphi 0, %s66
      %s83 = sphi 0, %s67
      %s89 = sphi 0, %s91
      %s92 = sphi 0, %s89
      %s93 = sphi 0, %s92
      %s109 = sphi 0, %s93
    $region4: #{_erase_call.1} parent=1 // loop_header_branch
      %14 = sbr.rel (%p12) target = $region8
    $region5: #{_erase_call.1} parent=1 // loop_body
      %s16 = ssub.s32 %s11, 1
      %s17 = ssub.s32 %s11, 2
      %s18 = sadd.s32 %s11, 1
      %s20 = sadd.s32 %s19, 1
      %p23 = scmp.eq.s32.totalorder %s11, 1
      %p24 = scmp.ne.s32.totalorder %s19, %s21
      %p25 = scmp.eq.s32.totalorder %s11, 0
      %p26 = por %p24, %p25
      %p27 = scmp.ne.s32.totalorder %s19, %s21
      %p28 = scmp.eq.s32.totalorder %s16, 1
      %p29 = por %p27, %p28
      %p30 = scmp.ne.s32.totalorder %s21, %s22
      %p31 = scmp.eq.s32.totalorder %s16, 0
      %p32 = por %p30, %p31
      %p33 = scmp.ne.s32.totalorder %s21, %s22
      %p34 = scmp.eq.s32.totalorder %s17, 1
      %p35 = por %p33, %p34
      %p37 = scmp.ne.s32.totalorder %s22, %s36
      %p38 = scmp.eq.s32.totalorder %s17, 0
      %p39 = por %p37, %p38
      %s41 = sadd.s32 %s40, 1
      %p44 = scmp.eq.s32.totalorder %s11, 1
      %p45 = scmp.ne.s32.totalorder %s40, %s42
      %p46 = scmp.eq.s32.totalorder %s11, 0
      %p47 = por %p45, %p46
      %p48 = scmp.ne.s32.totalorder %s40, %s42
      %p49 = scmp.eq.s32.totalorder %s16, 1
      %p50 = por %p48, %p49
      %p51 = scmp.ne.s32.totalorder %s42, %s43
      %p52 = scmp.eq.s32.totalorder %s16, 0
      %p53 = por %p51, %p52
      %p54 = scmp.ne.s32.totalorder %s42, %s43
      %p55 = scmp.eq.s32.totalorder %s17, 1
      %p56 = por %p54, %p55
      %p58 = scmp.ne.s32.totalorder %s43, %s57
      %p59 = scmp.eq.s32.totalorder %s17, 0
      %p60 = por %p58, %p59
      %s61 = ssub.s32 %s11, %s18
      %p62 = scmp.eq.s32.totalorder %s61, 0
      %s64 = sadd.s32 %s63, 1
      %s65 = scalar_select %p62, %s63, %s64
      %p68 = pneg %p62
      %p69 = scmp.eq.s32.totalorder %s11, 1
      %p70 = por %p68, %p69
      %p71 = scmp.ne.s32.totalorder %s63, %s66
      %p72 = scmp.eq.s32.totalorder %s11, 0
      %p73 = por %p71, %p72
      %p74 = scmp.ne.s32.totalorder %s63, %s66
      %p75 = scmp.eq.s32.totalorder %s16, 1
      %p76 = por %p74, %p75
      %p77 = scmp.ne.s32.totalorder %s66, %s67
      %p78 = scmp.eq.s32.totalorder %s16, 0
      %p79 = por %p77, %p78
      %p80 = scmp.ne.s32.totalorder %s66, %s67
      %p81 = scmp.eq.s32.totalorder %s17, 1
      %p82 = por %p80, %p81
      %p84 = scmp.ne.s32.totalorder %s67, %s83
      %p85 = scmp.eq.s32.totalorder %s17, 0
      %p86 = por %p84, %p85
      %s87 = ssub.s32 %s11, %s18
      %p88 = scmp.eq.s32.totalorder %s87, 0
      %s90 = sadd.s32 %s89, 1
      %s91 = scalar_select %p88, %s89, %s90
      %p94 = pneg %p88
      %p95 = scmp.eq.s32.totalorder %s11, 1
      %p96 = por %p94, %p95
      %p97 = scmp.ne.s32.totalorder %s89, %s92
      %p98 = scmp.eq.s32.totalorder %s11, 0
      %p99 = por %p97, %p98
      %p100 = scmp.ne.s32.totalorder %s89, %s92
      %p101 = scmp.eq.s32.totalorder %s16, 1
      %p102 = por %p100, %p101
      %p103 = scmp.ne.s32.totalorder %s92, %s93
      %p104 = scmp.eq.s32.totalorder %s16, 0
      %p105 = por %p103, %p104
      %p106 = scmp.ne.s32.totalorder %s92, %s93
      %p107 = scmp.eq.s32.totalorder %s17, 1
      %p108 = por %p106, %p107
      %p110 = scmp.ne.s32.totalorder %s93, %s109
      %p111 = scmp.eq.s32.totalorder %s17, 0
      %p112 = por %p110, %p111
      %p113 = scmp.le.s32.totalorder 1, %s11
      %p114 = scmp.lt.s32.totalorder %s11, 3
      %p115 = pnand %p113, %p114
      %p116 = pneg %p115
      // Predicated region
      $region9: #{_erase_call.1} parent=5 // pred_check
        _
      $region10: #{_erase_call.1} parent=5 // pred_check_branch
        %118 = sbr.rel (%p115) target = $region12
      $region11: #{_erase_call.1} parent=5 // pred_region
        %s119 = ssub.s32 %s11, 1
        // Predicated region
        $region13: #{_erase_call.1} parent=11 // pred_check
          %p120 = pneg %p32
        $region14: #{_erase_call.1} parent=11 // pred_check_branch
          %122 = sbr.rel (%p120) target = $region16
        $region15: #{_erase_call.1} parent=11 // pred_region
          %s124 = ssub.s32 16, 16
          %125 = vsyncadd [#allocation4], %s124
          %s127 = sshll.u32 %s0, 4
          %s128 = int_to_ptr.vmem [resolvable:$true] %s127
          %130 = dma.vmem_to_smem %s128, 16, [#allocation3], [#allocation4]
        $region16: #{_erase_call.1} parent=11 // pred_fallthru
          _
        // Predicated region
        $region17: #{_erase_call.1} parent=11 // pred_check
          %p131 = pneg %p53
        $region18: #{_erase_call.1} parent=11 // pred_check_branch
          %133 = sbr.rel (%p131) target = $region20
        $region19: #{_erase_call.1} parent=11 // pred_region
          _
        $region20: #{_erase_call.1} parent=11 // pred_fallthru
          _
      $region12: #{_erase_call.1} parent=5 // pred_fallthru
        _
      %p134 = scmp.lt.s32.totalorder %s11, 2
      // Predicated region
      $region21: #{_erase_call.1} parent=5 // pred_check
        %p135 = pneg %p134
      $region22: #{_erase_call.1} parent=5 // pred_check_branch
        %137 = sbr.rel (%p135) target = $region24
      $region23: #{_erase_call.1} parent=5 // pred_region
        // Predicated region
        $region25: #{_erase_call.1} parent=23 // pred_check
          %p138 = pneg %p73
        $region26: #{_erase_call.1} parent=23 // pred_check_branch
          %140 = sbr.rel (%p138) target = $region28
        $region27: #{_erase_call.1} parent=23 // pred_region
          %p141 = scmp.lt.s32.totalorder %s11, 1
          %s142 = scalar_select %p141, %s11, 1
          %s143 = smul.addr %s142, 3
          %s144 = smul.addr %s143, 8
          %s145 = scalar_lea.vmem %s2, %s144
        $region28: #{_erase_call.1} parent=23 // pred_fallthru
          _
      $region24: #{_erase_call.1} parent=5 // pred_fallthru
        _
      %p146 = scmp.le.s32.totalorder 1, %s11
      %p147 = scmp.lt.s32.totalorder %s11, 3
      %p148 = pnand %p146, %p147
      %p149 = pneg %p148
      // Predicated region
      $region29: #{_erase_call.1} parent=5 // pred_check
        _
      $region30: #{_erase_call.1} parent=5 // pred_check_branch
        %151 = sbr.rel (%p148) target = $region32
      $region31: #{_erase_call.1} parent=5 // pred_region
        %s152 = ssub.s32 %s11, 1
        // Predicated region
        $region33: #{_erase_call.1} parent=31 // pred_check
          %p153 = pneg %p32
        $region34: #{_erase_call.1} parent=31 // pred_check_branch
          %155 = sbr.rel (%p153) target = $region36
        $region35: #{_erase_call.1} parent=31 // pred_region
          %156 = dma.done [#allocation4], 16
        $region36: #{_erase_call.1} parent=31 // pred_fallthru
          _
        %157 = sfence
        %p158 = pneg %p32
        %p159 = pneg %p29
        %p160 = pneg %p53
        %p161 = pneg %p50
        %p162 = scmp.lt.s32.totalorder %s16, 1
        %s163 = scalar_select %p162, %s16, 1
        %s164 = smul.addr %s163, 3
        %s165 = smul.addr %s164, 8
        %s166 = scalar_lea.vmem %s2, %s165
        %p167 = pneg %p79
        %p168 = pneg %p76
        %p169 = pneg %p105
        %p170 = pneg %p102
        %p171 = scmp.lt.s32.totalorder %s16, 1
        %s172 = scalar_select %p171, %s16, 1
        %s173 = smul.addr %s172, 3
        %s174 = smul.addr %s173, 8
        %s175 = scalar_lea.vmem %s3, %s174
        %p176 = scmp.lt.s32.totalorder %s16, 1
        %s177 = scalar_select %p176, %s16, 1
        %s178 = smul.addr %s177, 3
        %s179 = smul.addr %s178, 8
        %s180 = scalar_lea.vmem %s2, %s179
        %p181 = scmp.lt.s32.totalorder %s16, 1
        %s182 = scalar_select %p181, %s16, 1
        %s183 = smul.addr %s182, 3
        %s184 = smul.addr %s183, 8
        %s185 = scalar_lea.vmem %s3, %s184
        %s187 = smul.u32 %s16, 32
        %v188 = vlaneseq
        %v189 = vshrl.u32 %v188, 7
        %v190 = vadd.s32 %v189, 8
        %v191 = vadd.s32 %v189, 16
        %v192 = vadd.s32 %v189, 24
        %v193 = vlaneseq
        %v194 = vand.u32 %v193, 127
        %v195 = vadd.s32 %v194, 128
        %v196 = vadd.s32 %v194, 256
        %s197 = sld [smem:[#allocation3]]
        %s198 = ssub.s32 %s197, %s187
        %s199 = sld [smem:[#allocation3 + $0x1]]
        %s200 = ssub.s32 %s199, %s187
        %s201 = sld [smem:[#allocation3 + $0x2]]
        %s202 = sld [smem:[#allocation3 + $0x3]]
        %v203 = vstv %s198
        %vm204 = vcmp.ge.s32.totalorder %v189, %v203
        %vm205 = vcmp.ge.s32.totalorder %v190, %v203
        %vm206 = vcmp.ge.s32.totalorder %v191, %v203
        %vm207 = vcmp.ge.s32.totalorder %v192, %v203
        %v208 = vstv %s200
        %vm209 = vcmp.lt.s32.totalorder %v189, %v208
        %vm210 = vcmp.lt.s32.totalorder %v190, %v208
        %vm211 = vcmp.lt.s32.totalorder %v191, %v208
        %vm212 = vcmp.lt.s32.totalorder %v192, %v208
        %vm213 = vmand %vm204, %vm209
        %vm214 = vmand %vm205, %vm210
        %vm215 = vmand %vm206, %vm211
        %vm216 = vmand %vm207, %vm212
        %v217 = vsel %vm213, 255, 0
        %v218 = vsel %vm214, 255, 0
        %v219 = vsel %vm215, 255, 0
        %v220 = vsel %vm216, 255, 0
        %v221 = vstv %s201
        %vm222 = vcmp.ge.s32.totalorder %v194, %v221
        %vm223 = vcmp.ge.s32.totalorder %v195, %v221
        %vm224 = vcmp.ge.s32.totalorder %v196, %v221
        %v225 = vstv %s202
        %vm226 = vcmp.lt.s32.totalorder %v194, %v225
        %vm227 = vcmp.lt.s32.totalorder %v195, %v225
        %vm228 = vcmp.lt.s32.totalorder %v196, %v225
        %vm229 = vmand %vm222, %vm226
        %vm230 = vmand %vm223, %vm227
        %vm231 = vmand %vm224, %vm228
        %v232 = vsel %vm229, 255, 0
        %v233 = vsel %vm230, 255, 0
        %v234 = vsel %vm231, 255, 0
        %v235 = vand.u32 %v217, %v232
        %v236 = vand.u32 %v217, %v233
        %v237 = vand.u32 %v217, %v234
        %v238 = vand.u32 %v218, %v232
        %v239 = vand.u32 %v218, %v233
        %v240 = vand.u32 %v218, %v234
        %v241 = vand.u32 %v219, %v232
        %v242 = vand.u32 %v219, %v233
        %v243 = vand.u32 %v219, %v234
        %v244 = vand.u32 %v220, %v232
        %v245 = vand.u32 %v220, %v233
        %v246 = vand.u32 %v220, %v234
        %s247 = sld [smem:[#allocation3 + $0x4]]
        %s248 = ssub.s32 %s247, %s187
        %s249 = sld [smem:[#allocation3 + $0x5]]
        %s250 = ssub.s32 %s249, %s187
        %s251 = sld [smem:[#allocation3 + $0x6]]
        %s252 = sld [smem:[#allocation3 + $0x7]]
        %v253 = vstv %s248
        %vm254 = vcmp.ge.s32.totalorder %v189, %v253
        %vm255 = vcmp.ge.s32.totalorder %v190, %v253
        %vm256 = vcmp.ge.s32.totalorder %v191, %v253
        %vm257 = vcmp.ge.s32.totalorder %v192, %v253
        %v258 = vstv %s250
        %vm259 = vcmp.lt.s32.totalorder %v189, %v258
        %vm260 = vcmp.lt.s32.totalorder %v190, %v258
        %vm261 = vcmp.lt.s32.totalorder %v191, %v258
        %vm262 = vcmp.lt.s32.totalorder %v192, %v258
        %vm263 = vmand %vm254, %vm259
        %vm264 = vmand %vm255, %vm260
        %vm265 = vmand %vm256, %vm261
        %vm266 = vmand %vm257, %vm262
        %v267 = vsel %vm263, 255, 0
        %v268 = vsel %vm264, 255, 0
        %v269 = vsel %vm265, 255, 0
        %v270 = vsel %vm266, 255, 0
        %v271 = vstv %s251
        %vm272 = vcmp.ge.s32.totalorder %v194, %v271
        %vm273 = vcmp.ge.s32.totalorder %v195, %v271
        %vm274 = vcmp.ge.s32.totalorder %v196, %v271
        %v275 = vstv %s252
        %vm276 = vcmp.lt.s32.totalorder %v194, %v275
        %vm277 = vcmp.lt.s32.totalorder %v195, %v275
        %vm278 = vcmp.lt.s32.totalorder %v196, %v275
        %vm279 = vmand %vm272, %vm276
        %vm280 = vmand %vm273, %vm277
        %vm281 = vmand %vm274, %vm278
        %v282 = vsel %vm279, 255, 0
        %v283 = vsel %vm280, 255, 0
        %v284 = vsel %vm281, 255, 0
        %v285 = vand.u32 %v267, %v282
        %v286 = vand.u32 %v267, %v283
        %v287 = vand.u32 %v267, %v284
        %v288 = vand.u32 %v268, %v282
        %v289 = vand.u32 %v268, %v283
        %v290 = vand.u32 %v268, %v284
        %v291 = vand.u32 %v269, %v282
        %v292 = vand.u32 %v269, %v283
        %v293 = vand.u32 %v269, %v284
        %v294 = vand.u32 %v270, %v282
        %v295 = vand.u32 %v270, %v283
        %v296 = vand.u32 %v270, %v284
        %v297 = vor.u32 %v235, %v285
        %v298 = vor.u32 %v236, %v286
        %v299 = vor.u32 %v237, %v287
        %v300 = vor.u32 %v238, %v288
        %v301 = vor.u32 %v239, %v289
        %v302 = vor.u32 %v240, %v290
        %v303 = vor.u32 %v241, %v291
        %v304 = vor.u32 %v242, %v292
        %v305 = vor.u32 %v243, %v293
        %v306 = vor.u32 %v244, %v294
        %v307 = vor.u32 %v245, %v295
        %v308 = vor.u32 %v246, %v296
        %v309 = vpack.c.b16 %v300, %v297
        %v310 = vpack.c.b16 %v306, %v303
        %v311 = vpack.c.b8 %v310, %v309
        %v312 = vpack.c.b16 %v301, %v298
        %v313 = vpack.c.b16 %v307, %v304
        %v314 = vpack.c.b8 %v313, %v312
        %v315 = vpack.c.b16 %v302, %v299
        %v316 = vpack.c.b16 %v308, %v305
        %v317 = vpack.c.b8 %v316, %v315
        %s318 = sld [smem:[#allocation2]]
        %s319 = sand.u32 %s318, 255
        %v320 = vld [vmem:[%s180] sm:$0xff]
        %v321 = vld [vmem:[%s180 + $0x8] sm:$0xff]
        %v322 = vld [vmem:[%s180 + $0x10] sm:$0xff]
        %v323 = vxor.u32 %v311, 4294967295
        %v324 = vxor.u32 %v314, 4294967295
        %v325 = vxor.u32 %v317, 4294967295
        %v326 = vand.u32 %v320, %v323
        %v327 = vand.u32 %v321, %v324
        %v328 = vand.u32 %v322, %v325
        %s329 = sshll.u32 %s319, 8
        %s330 = sor.u32 %s319, %s329
        %s331 = sshll.u32 %s330, 16
        %s332 = sor.u32 %s330, %s331
        %s333 = sshll.u32 %s332, 24
        %s334 = sor.u32 %s332, %s333
        %v335 = vstv %s334
        %v337 = vand.u32 %v335, %v311
        %v338 = vand.u32 %v335, %v314
        %v339 = vand.u32 %v335, %v317
        %v340 = vor.u32 %v326, %v337
        %v341 = vor.u32 %v327, %v338
        %v342 = vor.u32 %v328, %v339
        %343 = vst [vmem:[%s185] sm:$0xff] %v340
        %344 = vst [vmem:[%s185 + $0x8] sm:$0xff] %v341
        %345 = vst [vmem:[%s185 + $0x10] sm:$0xff] %v342
        %p346 = scmp.lt.s32.totalorder %s16, 1
        %s347 = scalar_select %p346, %s16, 1
        %s348 = smul.addr %s347, 3
        %s349 = smul.addr %s348, 8
        %s350 = scalar_lea.vmem %s3, %s349
        // Predicated region
        $region37: #{_erase_call.1} parent=31 // pred_check
          %p351 = pneg %p102
        $region38: #{_erase_call.1} parent=31 // pred_check_branch
          %353 = sbr.rel (%p351) target = $region40
        $region39: #{_erase_call.1} parent=31 // pred_region
          _
        $region40: #{_erase_call.1} parent=31 // pred_fallthru
          _
      $region32: #{_erase_call.1} parent=5 // pred_fallthru
        _
      %p354 = scmp.le.s32.totalorder 2, %s11
      // Predicated region
      $region41: #{_erase_call.1} parent=5 // pred_check
        %p355 = pneg %p354
      $region42: #{_erase_call.1} parent=5 // pred_check_branch
        %357 = sbr.rel (%p355) target = $region44
      $region43: #{_erase_call.1} parent=5 // pred_region
        %s358 = ssub.s32 %s11, 2
        // Predicated region
        $region45: #{_erase_call.1} parent=43 // pred_check
          %p359 = pneg %p108
        $region46: #{_erase_call.1} parent=43 // pred_check_branch
          %361 = sbr.rel (%p359) target = $region48
        $region47: #{_erase_call.1} parent=43 // pred_region
          %p362 = scmp.lt.s32.totalorder %s17, 1
          %s363 = scalar_select %p362, %s17, 1
          %s364 = smul.addr %s363, 3
          %s365 = smul.addr %s364, 8
          %s366 = scalar_lea.vmem %s3, %s365
        $region48: #{_erase_call.1} parent=43 // pred_fallthru
          _
      $region44: #{_erase_call.1} parent=5 // pred_fallthru
        _
    $region6: #{_erase_call.1} parent=1 // loop_footer
      %s15 = sadd.s32 1, %s11
    $region7: #{_erase_call.1} parent=1 // loop_footer_branch
      %10 = sbr.rel target = $region3
    $region8: #{_erase_call.1} parent=1 // loop_exit
      _
    %367 = vsyncpa [#allocation4], 1
    %s368 = scalar_lea.sflag [#allocation4], 1
    %369 = vsyncpa %s368, 1

</llo_original>
